<compile_context>
chip_gen: v7x
topology: tpu7x:2x2x1
jax: 0.10.0
libtpu: 0.0.40
codegen_flags: <defaults>
</compile_context>

<pallas_src>
import functools

import jax
import jax.numpy as jnp
from jax.experimental import pallas as pl
from jax.experimental.pallas import tpu as pltpu


def _round_up(x: int, m: int) -> int:
    return (x + m - 1) // m * m


def _generic_basis_kernel(xb_ref, xf_ref, wb_ref, wf_ref, bb_ref, bf_ref,
                          ob_ref, of_ref):
    """One batch tile: two MXU matmuls (f32 accumulation) + f32 bias add.

    xb/xf: (TM, K) native dtype    wb: (K, Nb)  wf: (K, Nf)  (compute dtype)
    bb: (1, Nb) f32                bf: (1, Nf) f32
    ob: (TM, Nb) out dtype         of: (TM, Nf) out dtype
    """
    cdt = wb_ref.dtype
    xb = xb_ref[...].astype(cdt)   # in-vreg cast (VPU), no wrapper HBM pass
    xf = xf_ref[...].astype(cdt)
    # TODO(synk): when nb==nf==128 and theta is shared, fuse into one
    # (TM,K)x(K,256) dot to fill the 256-wide MXU; mem-bound here, so skipped.
    back = jnp.dot(xb, wb_ref[...], preferred_element_type=jnp.float32)
    fore = jnp.dot(xf, wf_ref[...], preferred_element_type=jnp.float32)
    ob_ref[...] = (back + bb_ref[...]).astype(ob_ref.dtype)
    of_ref[...] = (fore + bf_ref[...]).astype(of_ref.dtype)


def _vmem_capacity_bytes() -> int:
    """Generation-aware VMEM capacity; conservative fallback = v7x per-TC."""
    try:
        info = pltpu.get_tpu_info()
        cap = getattr(info, "vmem_capacity_bytes", None)
        if cap:
            return int(cap)
    except Exception:
        pass
    return 64 * 1024 * 1024


def _choose_tm_and_vmem(batch: int, k: int, nb: int, nf: int,
                        in_itemsize: int, w_itemsize: int, out_itemsize: int):
    """Pick a batch tile that fits this generation's VMEM with correct
    per-dtype accounting, keeping enough grid steps to pipeline / megacore."""
    cap = _vmem_capacity_bytes()
    budget = int(cap * 0.70)                      # headroom for compiler scratch
    k_lane = _round_up(k, 128)                    # activations: K on lanes
    k_sub = _round_up(k, 32 // max(w_itemsize, 1))  # weights: K on sublanes
    n_tiles = _round_up(nb, 128) + _round_up(nf, 128)

    def need(tm):
        return (2 * 2 * tm * k_lane * in_itemsize     # 2 inputs, double-buffered
                + 2 * tm * n_tiles * out_itemsize     # 2 outputs, double-buffered
                + k_sub * n_tiles * w_itemsize        # weights (single-buffered)
                + 2 * n_tiles * 4)                    # f32 biases

    MIN_STEPS = 8   # keep >= ~8 steps so v7x's 2 TCs + the DMA pipeline stay busy
    tm = max(8, min(2048,
                    _round_up(pl.cdiv(batch, MIN_STEPS), 8),
                    _round_up(batch, 8)))
    while need(tm) > budget and tm > 8:
        tm = max(8, _round_up(tm // 2, 8))
    # TODO(synk): if resident weights alone approach the budget (huge theta /
    # head sizes), add a trailing "arbitrary" K grid axis with an f32 VMEM
    # accumulator + pl.when init/finalize instead of collapsing tm.
    vmem_limit = int(min(max(need(tm) + (4 << 20), 16 << 20), int(cap * 0.8)))
    return tm, vmem_limit


# Grid-invariant operands (constant index_map): single-buffer to save VMEM.
try:
    _RESIDENT = dict(pipeline_mode=pl.Buffered(1))
    pl.BlockSpec((8, 128), lambda i: (0, 0), **_RESIDENT)  # validate kwarg
except Exception:   # pragma: no cover - older API without pipeline_mode
    _RESIDENT = {}


def _fused_generic_basis(theta_backcast, theta_forecast, wb_t, wf_t, bb, bf, *,
                         backcast_size: int, forecast_size: int, out_dtype):
    assert theta_backcast.shape == theta_forecast.shape, "theta shapes must match"
    lead_shape = theta_backcast.shape[:-1]
    k = theta_backcast.shape[-1]

    # No dtype cast and no padding here (both would be full extra HBM passes).
    xb = theta_backcast.reshape(-1, k)
    xf = theta_forecast.reshape(-1, k)
    batch = xb.shape[0]

    nb, nf = backcast_size, forecast_size

    tm, vmem_limit = _choose_tm_and_vmem(
        batch, k, nb, nf,
        jnp.dtype(xb.dtype).itemsize,
        jnp.dtype(wb_t.dtype).itemsize,
        jnp.dtype(out_dtype).itemsize)

    grid = (pl.cdiv(batch, tm),)   # ragged edge block: garbage rows never hit HBM

    backcast, forecast = pl.pallas_call(
        _generic_basis_kernel,
        out_shape=(jax.ShapeDtypeStruct((batch, nb), out_dtype),
                   jax.ShapeDtypeStruct((batch, nf), out_dtype)),
        grid_spec=pltpu.PrefetchScalarGridSpec(
            num_scalar_prefetch=0,
            grid=grid,
            in_specs=[
                pl.BlockSpec((tm, k), lambda i: (i, 0)),             # theta_backcast
                pl.BlockSpec((tm, k), lambda i: (i, 0)),             # theta_forecast
                pl.BlockSpec((k, nb), lambda i: (0, 0), **_RESIDENT),  # Wb^T
                pl.BlockSpec((k, nf), lambda i: (0, 0), **_RESIDENT),  # Wf^T
                pl.BlockSpec((1, nb), lambda i: (0, 0), **_RESIDENT),  # bb
                pl.BlockSpec((1, nf), lambda i: (0, 0), **_RESIDENT),  # bf
            ],
            out_specs=[
                pl.BlockSpec((tm, nb), lambda i: (i, 0)),
                pl.BlockSpec((tm, nf), lambda i: (i, 0)),
            ],
        ),
        compiler_params=pltpu.CompilerParams(
            dimension_semantics=("parallel",),   # shard batch tiles across TCs
            vmem_limit_bytes=vmem_limit,
        ),
    )(xb, xf, wb_t, wf_t, bb, bf)

    return (backcast.reshape(*lead_shape, nb),
            forecast.reshape(*lead_shape, nf))


class GenericBasis:
    """JAX/Pallas port of the PyTorch GenericBasis module (two nn.Linear heads)."""

    def __init__(self, backcast_size: int, forecast_size: int, theta_size: int,
                 *, key=None, dtype=jnp.float32, compute_dtype=jnp.bfloat16):
        if key is None:
            key = jax.random.PRNGKey(0)
        kb_w, kb_b, kf_w, kf_b = jax.random.split(key, 4)

        # nn.Linear(theta_size, out): W (out, in), b (out,), bound = 1/sqrt(in).
        bound = 1.0 / (theta_size ** 0.5)
        self.Wb = jax.random.uniform(kb_w, (backcast_size, theta_size), dtype,
                                     -bound, bound)
        self.bb = jax.random.uniform(kb_b, (backcast_size,), dtype, -bound, bound)
        self.Wf = jax.random.uniform(kf_w, (forecast_size, theta_size), dtype,
                                     -bound, bound)
        self.bf = jax.random.uniform(kf_b, (forecast_size,), dtype, -bound, bound)

        self.backcast_size = backcast_size
        self.forecast_size = forecast_size
        self.theta_size = theta_size
        self.out_dtype = dtype
        # bf16 by default on all generations (v5e MXU is bf16-native too);
        # accumulation and bias add stay f32 inside the kernel.
        self.compute_dtype = compute_dtype if compute_dtype is not None else dtype

        cdt = self.compute_dtype
        # Pre-transposed weights (K, N) in the compute dtype; no lane padding —
        # outputs are stored unpadded to avoid write amplification + a slice.
        self.wb_t = self.Wb.T.astype(cdt)
        self.wf_t = self.Wf.T.astype(cdt)
        self.bb2 = self.bb.astype(jnp.float32).reshape(1, backcast_size)
        self.bf2 = self.bf.astype(jnp.float32).reshape(1, forecast_size)

        self._forward = functools.partial(
            _fused_generic_basis,
            backcast_size=backcast_size,
            forecast_size=forecast_size,
            out_dtype=self.out_dtype,
        )

    def __call__(self, theta_backcast, theta_forecast):
        return self._forward(theta_backcast, theta_forecast,
                             self.wb_t, self.wf_t, self.bb2, self.bf2)


if __name__ == "__main__":
    key = jax.random.PRNGKey(0)
    k_params, k_tb, k_tf = jax.random.split(key, 3)

    batch = 8
    theta_size = 32
    backcast_size = 16
    forecast_size = 8

    theta_backcast = jax.random.normal(k_tb, (batch, theta_size), jnp.float32)
    theta_forecast = jax.random.normal(k_tf, (batch, theta_size), jnp.float32)

    # Reference (same math as torch nn.Linear), in f32.
    mod_f32 = GenericBasis(backcast_size, forecast_size, theta_size,
                           key=k_params, compute_dtype=jnp.float32)
    ref_back = theta_backcast @ mod_f32.Wb.T + mod_f32.bb
    ref_fore = theta_forecast @ mod_f32.Wf.T + mod_f32.bf

    # f32-compute path: tight tolerance.
    back32, fore32 = mod_f32(theta_backcast, theta_forecast)
    jax.block_until_ready((back32, fore32))
    assert back32.shape == (batch, backcast_size)
    assert fore32.shape == (batch, forecast_size)
    assert jnp.allclose(back32, ref_back, atol=1e-4, rtol=1e-4)
    assert jnp.allclose(fore32, ref_fore, atol=1e-4, rtol=1e-4)

    # Default bf16-compute path (f32 accumulation): loose tolerance.
    mod_bf16 = GenericBasis(backcast_size, forecast_size, theta_size, key=k_params)
    back16, fore16 = mod_bf16(theta_backcast, theta_forecast)
    jax.block_until_ready((back16, fore16))
    assert back16.shape == (batch, backcast_size)
    assert fore16.shape == (batch, forecast_size)
    assert jnp.allclose(back16, ref_back, atol=5e-2, rtol=5e-2)
    assert jnp.allclose(fore16, ref_fore, atol=5e-2, rtol=5e-2)

    print("KERNEL_OK")
</pallas_src>

<mosaic_0001>
module attributes {stable_mosaic.version = 11 : i64} {
  func.func @_generic_basis_kernel(%arg0: i32, %arg1: memref<8x32xf32, #tpu.memory_space<vmem>>, %arg2: memref<8x32xf32, #tpu.memory_space<vmem>>, %arg3: memref<32x16xf32, #tpu.memory_space<vmem>>, %arg4: memref<32x8xf32, #tpu.memory_space<vmem>>, %arg5: memref<1x16xf32, #tpu.memory_space<vmem>>, %arg6: memref<1x8xf32, #tpu.memory_space<vmem>>, %arg7: memref<8x16xf32, #tpu.memory_space<vmem>>, %arg8: memref<8x8xf32, #tpu.memory_space<vmem>>) attributes {dimension_semantics = [#tpu.dimension_semantics<parallel>], iteration_bounds = array<i64: 1>, scalar_prefetch = 0 : i64, scratch_operands = 0 : i64, tpu.core_type = #tpu.core_type<tc>, window_params = [{transform_indices = @transform_0, window_bounds = array<i64: 8, 32>}, {transform_indices = @transform_1, window_bounds = array<i64: 8, 32>}, {pipeline_mode = #tpu.pipeline_mode<synchronous>, transform_indices = @transform_2, window_bounds = array<i64: 32, 16>}, {pipeline_mode = #tpu.pipeline_mode<synchronous>, transform_indices = @transform_3, window_bounds = array<i64: 32, 8>}, {pipeline_mode = #tpu.pipeline_mode<synchronous>, transform_indices = @transform_4, window_bounds = array<i64: 1, 16>}, {pipeline_mode = #tpu.pipeline_mode<synchronous>, transform_indices = @transform_5, window_bounds = array<i64: 1, 8>}, {transform_indices = @transform_6, window_bounds = array<i64: 8, 16>}, {transform_indices = @transform_7, window_bounds = array<i64: 8, 8>}]} {
    %c0 = arith.constant 0 : index
    %c0_0 = arith.constant 0 : index
    %0 = vector.load %arg1[%c0, %c0_0] : memref<8x32xf32, #tpu.memory_space<vmem>>, vector<8x32xf32>
    %c0_1 = arith.constant 0 : index
    %c0_2 = arith.constant 0 : index
    %1 = vector.load %arg2[%c0_1, %c0_2] : memref<8x32xf32, #tpu.memory_space<vmem>>, vector<8x32xf32>
    %c0_3 = arith.constant 0 : index
    %c0_4 = arith.constant 0 : index
    %2 = vector.load %arg3[%c0_3, %c0_4] : memref<32x16xf32, #tpu.memory_space<vmem>>, vector<32x16xf32>
    %cst = arith.constant dense<0.000000e+00> : vector<8x16xf32>
    %3 = tpu.matmul %0, %2, %cst {dimension_numbers = #tpu.dot_dimension_numbers<[1], [0], [0], [1], [0, 0, 1, 1], [], []>} : vector<8x32xf32>, vector<32x16xf32>, vector<8x16xf32> -> vector<8x16xf32>
    %c0_5 = arith.constant 0 : index
    %c0_6 = arith.constant 0 : index
    %4 = vector.load %arg4[%c0_5, %c0_6] : memref<32x8xf32, #tpu.memory_space<vmem>>, vector<32x8xf32>
    %cst_7 = arith.constant dense<0.000000e+00> : vector<8x8xf32>
    %5 = tpu.matmul %1, %4, %cst_7 {dimension_numbers = #tpu.dot_dimension_numbers<[1], [0], [0], [1], [0, 0, 1, 1], [], []>} : vector<8x32xf32>, vector<32x8xf32>, vector<8x8xf32> -> vector<8x8xf32>
    %c0_8 = arith.constant 0 : index
    %c0_9 = arith.constant 0 : index
    %6 = vector.load %arg5[%c0_8, %c0_9] : memref<1x16xf32, #tpu.memory_space<vmem>>, vector<1x16xf32>
    %7 = vector.broadcast %6 : vector<1x16xf32> to vector<8x16xf32>
    %8 = arith.addf %3, %7 : vector<8x16xf32>
    %c0_10 = arith.constant 0 : index
    %c0_11 = arith.constant 0 : index
    %9 = vector.load %arg7[%c0_10, %c0_11] : memref<8x16xf32, #tpu.memory_space<vmem>>, vector<8x16xf32>
    tpu.vector_store %arg7[%c0_10, %c0_11], %8 {strides = array<i32>} : memref<8x16xf32, #tpu.memory_space<vmem>>, vector<8x16xf32>,
    %c0_12 = arith.constant 0 : index
    %c0_13 = arith.constant 0 : index
    %10 = vector.load %arg6[%c0_12, %c0_13] : memref<1x8xf32, #tpu.memory_space<vmem>>, vector<1x8xf32>
    %11 = vector.broadcast %10 : vector<1x8xf32> to vector<8x8xf32>
    %12 = arith.addf %5, %11 : vector<8x8xf32>
    %c0_14 = arith.constant 0 : index
    %c0_15 = arith.constant 0 : index
    %13 = vector.load %arg8[%c0_14, %c0_15] : memref<8x8xf32, #tpu.memory_space<vmem>>, vector<8x8xf32>
    tpu.vector_store %arg8[%c0_14, %c0_15], %12 {strides = array<i32>} : memref<8x8xf32, #tpu.memory_space<vmem>>, vector<8x8xf32>,
    return
  }
  func.func @transform_0(%arg0: i32) -> (i32, i32) {
    %c0_i32 = arith.constant 0 : i32
    %c0_i32_0 = arith.constant 0 : i32
    return %arg0, %c0_i32 : i32, i32
  }
  func.func @transform_1(%arg0: i32) -> (i32, i32) {
    %c0_i32 = arith.constant 0 : i32
    %c0_i32_0 = arith.constant 0 : i32
    return %arg0, %c0_i32 : i32, i32
  }
  func.func @transform_2(%arg0: i32) -> (i32, i32) {
    %c0_i32 = arith.constant 0 : i32
    %c0_i32_0 = arith.constant 0 : i32
    %c0_i32_1 = arith.constant 0 : i32
    return %c0_i32, %c0_i32_0 : i32, i32
  }
  func.func @transform_3(%arg0: i32) -> (i32, i32) {
    %c0_i32 = arith.constant 0 : i32
    %c0_i32_0 = arith.constant 0 : i32
    %c0_i32_1 = arith.constant 0 : i32
    return %c0_i32, %c0_i32_0 : i32, i32
  }
  func.func @transform_4(%arg0: i32) -> (i32, i32) {
    %c0_i32 = arith.constant 0 : i32
    %c0_i32_0 = arith.constant 0 : i32
    %c0_i32_1 = arith.constant 0 : i32
    return %c0_i32, %c0_i32_0 : i32, i32
  }
  func.func @transform_5(%arg0: i32) -> (i32, i32) {
    %c0_i32 = arith.constant 0 : i32
    %c0_i32_0 = arith.constant 0 : i32
    %c0_i32_1 = arith.constant 0 : i32
    return %c0_i32, %c0_i32_0 : i32, i32
  }
  func.func @transform_6(%arg0: i32) -> (i32, i32) {
    %c0_i32 = arith.constant 0 : i32
    %c0_i32_0 = arith.constant 0 : i32
    return %arg0, %c0_i32 : i32, i32
  }
  func.func @transform_7(%arg0: i32) -> (i32, i32) {
    %c0_i32 = arith.constant 0 : i32
    %c0_i32_0 = arith.constant 0 : i32
    return %arg0, %c0_i32 : i32, i32
  }
}

</mosaic_0001>

<llo_original>
// kernel: tpu_custom_call.1
$region0: #{tpu_custom_call.1}
  #allocation0 [shape = 'u32[]', space=smem, size = 0x4, offset = 0x4, fixed_abs, tag = 'smem constant byte address 0x4 - core index']
  #allocation1 [shape = 'u32[144,128]{1,0:T(1,128)}', space=vmem, size = 0x12000, scoped, tag = 'internal scratch']
  %s0 = inlined_call_operand.vmem [shape: f32[8,32], index: 0, kind: input, shape index: {}]
  %s1 = inlined_call_operand.vmem [shape: f32[8,32], index: 1, kind: input, shape index: {}]
  %s2 = inlined_call_operand.vmem [shape: f32[32,16], index: 2, kind: input, shape index: {}]
  %s3 = inlined_call_operand.vmem [shape: f32[32,8], index: 3, kind: input, shape index: {}]
  %s4 = inlined_call_operand.vmem [shape: f32[1,16], index: 4, kind: input, shape index: {}]
  %s5 = inlined_call_operand.vmem [shape: f32[1,8], index: 5, kind: input, shape index: {}]
  %s6 = inlined_call_operand.hbm [shape: f32[8,16], index: 6, kind: output, shape index: {0}]
  %s7 = inlined_call_operand.hbm [shape: f32[8,8], index: 7, kind: output, shape index: {1}]
  %8 = xla_tuple %s6, %s7
  %s9 = sld [smem:[#allocation0]]
  $region42: #{tpu_custom_call.1} parent=0
    _
  %s11 = ssub.s32 1, %s9
  %s12 = scalar_select 0, %s11, %s9
  $region1: #{tpu_custom_call.1} parent=0
    #allocation2 [shape = 'u8[4096]{0}', space=vmem, size = 0x1000, scoped, tag = 'output window, operand 0, single buffered']
    #allocation3 [shape = 's32[1]{0}', space=sflag, size = 0x4, scoped, tag = 'scoped memory for tpu_custom_call.1']
    #allocation4 [shape = 'u8[4096]{0}', space=vmem, size = 0x1000, scoped, tag = 'output window, operand 1, single buffered']
    #allocation5 [shape = 's32[1]{0}', space=sflag, size = 0x4, scoped, tag = 'scoped memory for tpu_custom_call.1']
    %13 = vsyncpa [#allocation3], 0
    %14 = vsyncpa [#allocation5], 0
    // Predicated region
    $region2: #{tpu_custom_call.1} parent=1 // pred_check
      _
    $region3: #{tpu_custom_call.1} parent=1 // pred_check_branch
      %16 = sbr.rel (0) target = $region5
    $region4: #{tpu_custom_call.1} parent=1 // pred_region
      _
    $region5: #{tpu_custom_call.1} parent=1 // pred_fallthru
      _
    // Predicated region
    $region6: #{tpu_custom_call.1} parent=1 // pred_check
      _
    $region7: #{tpu_custom_call.1} parent=1 // pred_check_branch
      %18 = sbr.rel (0) target = $region9
    $region8: #{tpu_custom_call.1} parent=1 // pred_region
      _
    $region9: #{tpu_custom_call.1} parent=1 // pred_fallthru
      _
    // Predicated region
    $region10: #{tpu_custom_call.1} parent=1 // pred_check
      _
    $region11: #{tpu_custom_call.1} parent=1 // pred_check_branch
      %20 = sbr.rel (0) target = $region13
    $region12: #{tpu_custom_call.1} parent=1 // pred_region
      _
    $region13: #{tpu_custom_call.1} parent=1 // pred_fallthru
      _
    // Predicated region
    $region14: #{tpu_custom_call.1} parent=1 // pred_check
      _
    $region15: #{tpu_custom_call.1} parent=1 // pred_check_branch
      %22 = sbr.rel (0) target = $region17
    $region16: #{tpu_custom_call.1} parent=1 // pred_region
      _
    $region17: #{tpu_custom_call.1} parent=1 // pred_fallthru
      _
    // Predicated region
    $region18: #{tpu_custom_call.1} parent=1 // pred_check
      _
    $region19: #{tpu_custom_call.1} parent=1 // pred_check_branch
      %24 = sbr.rel (0) target = $region21
    $region20: #{tpu_custom_call.1} parent=1 // pred_region
      _
    $region21: #{tpu_custom_call.1} parent=1 // pred_fallthru
      _
    // Predicated region
    $region22: #{tpu_custom_call.1} parent=1 // pred_check
      _
    $region23: #{tpu_custom_call.1} parent=1 // pred_check_branch
      %26 = sbr.rel (0) target = $region25
    $region24: #{tpu_custom_call.1} parent=1 // pred_region
      _
    $region25: #{tpu_custom_call.1} parent=1 // pred_fallthru
      _
    %v27 = vld [vmem:[%s0] sm:$0xff]
    %v28 = vld [vmem:[%s1] sm:$0xff]
    %v29 = vld [vmem:[%s2] sm:$0xff]
    %v30 = vld [vmem:[%s2 + $0x8] sm:$0xff]
    %v31 = vld [vmem:[%s2 + $0x10] sm:$0xff]
    %v32 = vld [vmem:[%s2 + $0x18] sm:$0xff]
    %v33 = vld [vmem:[%s3] sm:$0xff]
    %v34 = vld [vmem:[%s3 + $0x8] sm:$0xff]
    %v35 = vld [vmem:[%s3 + $0x10] sm:$0xff]
    %v36 = vld [vmem:[%s3 + $0x18] sm:$0xff]
    %v37 = vld [vmem:[%s4] sm:$0x1]
    %v39 = vlaneseq
    %v40 = vshrl.u32 %v39, 7
    %v41 = vsub.s32 0, %v40
    %v42 = vrot.slane %v37, %v41
    %vm44 = vcmask 261120
    %v46 = vsel %vm44, %v27, 0
    %48 = vmatprep.subr.mxu0 0.0
    %49 = vmatpush1.msra.mxu0 %v29
    %50 = vmatprep.subr.mxu0 0.0
    %51 = vmatpush1.msra.mxu0 %v30
    %52 = vmatprep.subr.mxu0 0.0
    %53 = vmatpush1.msra.mxu0 %v31
    %54 = vmatprep.subr.mxu0 0.0
    %55 = vmatpush1.msra.mxu0 %v32
    %56 = vmatprep.subr.mxu0 0.0
    %57 = vmatpush1.msra.mxu0 0.0
    %58 = vmatprep.subr.mxu0 0.0
    %59 = vmatpush1.msra.mxu0 0.0
    %60 = vmatprep.subr.mxu0 0.0
    %61 = vmatpush1.msra.mxu0 0.0
    %62 = vmatprep.subr.mxu0 0.0
    %63 = vmatpush1.msra.mxu0 0.0
    %64 = vmatprep.subr.mxu0 0.0
    %65 = vmatpush1.msra.mxu0 0.0
    %66 = vmatprep.subr.mxu0 0.0
    %67 = vmatpush1.msra.mxu0 0.0
    %68 = vmatprep.subr.mxu0 0.0
    %69 = vmatpush1.msra.mxu0 0.0
    %70 = vmatprep.subr.mxu0 0.0
    %71 = vmatpush1.msra.mxu0 0.0
    %72 = vmatprep.subr.mxu0 0.0
    %73 = vmatpush1.msra.mxu0 0.0
    %74 = vmatprep.subr.mxu0 0.0
    %75 = vmatpush1.msra.mxu0 0.0
    %76 = vmatprep.subr.mxu0 0.0
    %77 = vmatpush1.msra.mxu0 0.0
    %78 = vmatprep.subr.mxu0 0.0
    %79 = vmatpush1.msra.mxu0 0.0
    %80 = vmatprep.subr.mxu0 0.0
    %81 = vmatpush1.msra.mxu0 0.0
    %82 = vmatprep.subr.mxu0 0.0
    %83 = vmatpush1.msra.mxu0 0.0
    %84 = vmatprep.subr.mxu0 0.0
    %85 = vmatpush1.msra.mxu0 0.0
    %86 = vmatprep.subr.mxu0 0.0
    %87 = vmatpush1.msra.mxu0 0.0
    %88 = vmatprep.subr.mxu0 0.0
    %89 = vmatpush1.msra.mxu0 0.0
    %90 = vmatprep.subr.mxu0 0.0
    %91 = vmatpush1.msra.mxu0 0.0
    %92 = vmatprep.subr.mxu0 0.0
    %93 = vmatpush1.msra.mxu0 0.0
    %94 = vmatprep.subr.mxu0 0.0
    %95 = vmatpush1.msra.mxu0 0.0
    %96 = vmatprep.subr.mxu0 0.0
    %97 = vmatpush1.msra.mxu0 0.0
    %98 = vmatprep.subr.mxu0 0.0
    %99 = vmatpush1.msra.mxu0 0.0
    %100 = vmatprep.subr.mxu0 0.0
    %101 = vmatpush1.msra.mxu0 0.0
    %102 = vmatprep.subr.mxu0 0.0
    %103 = vmatpush1.msra.mxu0 0.0
    %104 = vmatprep.subr.mxu0 0.0
    %105 = vmatpush1.msra.mxu0 0.0
    %106 = vmatprep.subr.mxu0 0.0
    %107 = vmatpush1.msra.mxu0 0.0
    %108 = vmatprep.subr.mxu0 0.0
    %109 = vmatpush1.msra.mxu0 0.0
    %110 = vmatprep.subr.mxu0 0.0
    %111 = vmatpush1.msra.mxu0 0.0
    %112 = vmatprep.mubr.f32.mxu0 0.0
    %113 = vmatmul.mubr.f32.gmra.mrb[0].mxu0 %v46
    %v114 = vpop.f32.mrb[0].mxu0
    %v115 = vadd.f32 %v42, %v114
    %v116 = vpop.f32.mrb[0].mxu0
    %117 = vdwg.mxu0
    %vm118 = vcmask 130048
    %119 = vst.msk [vmem:[#allocation2] sm:$0xff] %vm118, %v115
    %v120 = vld [vmem:[%s5] sm:$0x1]
    %v122 = vlaneseq
    %v123 = vshrl.u32 %v122, 7
    %v124 = vsub.s32 0, %v123
    %v125 = vrot.slane %v120, %v124
    %v128 = vsel %vm44, %v28, 0
    %130 = vmatprep.subr.mxu0 0.0
    %131 = vmatpush1.msra.mxu0 %v33
    %132 = vmatprep.subr.mxu0 0.0
    %133 = vmatpush1.msra.mxu0 %v34
    %134 = vmatprep.subr.mxu0 0.0
    %135 = vmatpush1.msra.mxu0 %v35
    %136 = vmatprep.subr.mxu0 0.0
    %137 = vmatpush1.msra.mxu0 %v36
    %138 = vmatprep.subr.mxu0 0.0
    %139 = vmatpush1.msra.mxu0 0.0
    %140 = vmatprep.subr.mxu0 0.0
    %141 = vmatpush1.msra.mxu0 0.0
    %142 = vmatprep.subr.mxu0 0.0
    %143 = vmatpush1.msra.mxu0 0.0
    %144 = vmatprep.subr.mxu0 0.0
    %145 = vmatpush1.msra.mxu0 0.0
    %146 = vmatprep.subr.mxu0 0.0
    %147 = vmatpush1.msra.mxu0 0.0
    %148 = vmatprep.subr.mxu0 0.0
    %149 = vmatpush1.msra.mxu0 0.0
    %150 = vmatprep.subr.mxu0 0.0
    %151 = vmatpush1.msra.mxu0 0.0
    %152 = vmatprep.subr.mxu0 0.0
    %153 = vmatpush1.msra.mxu0 0.0
    %154 = vmatprep.subr.mxu0 0.0
    %155 = vmatpush1.msra.mxu0 0.0
    %156 = vmatprep.subr.mxu0 0.0
    %157 = vmatpush1.msra.mxu0 0.0
    %158 = vmatprep.subr.mxu0 0.0
    %159 = vmatpush1.msra.mxu0 0.0
    %160 = vmatprep.subr.mxu0 0.0
    %161 = vmatpush1.msra.mxu0 0.0
    %162 = vmatprep.subr.mxu0 0.0
    %163 = vmatpush1.msra.mxu0 0.0
    %164 = vmatprep.subr.mxu0 0.0
    %165 = vmatpush1.msra.mxu0 0.0
    %166 = vmatprep.subr.mxu0 0.0
    %167 = vmatpush1.msra.mxu0 0.0
    %168 = vmatprep.subr.mxu0 0.0
    %169 = vmatpush1.msra.mxu0 0.0
    %170 = vmatprep.subr.mxu0 0.0
    %171 = vmatpush1.msra.mxu0 0.0
    %172 = vmatprep.subr.mxu0 0.0
    %173 = vmatpush1.msra.mxu0 0.0
    %174 = vmatprep.subr.mxu0 0.0
    %175 = vmatpush1.msra.mxu0 0.0
    %176 = vmatprep.subr.mxu0 0.0
    %177 = vmatpush1.msra.mxu0 0.0
    %178 = vmatprep.subr.mxu0 0.0
    %179 = vmatpush1.msra.mxu0 0.0
    %180 = vmatprep.subr.mxu0 0.0
    %181 = vmatpush1.msra.mxu0 0.0
    %182 = vmatprep.subr.mxu0 0.0
    %183 = vmatpush1.msra.mxu0 0.0
    %184 = vmatprep.subr.mxu0 0.0
    %185 = vmatpush1.msra.mxu0 0.0
    %186 = vmatprep.subr.mxu0 0.0
    %187 = vmatpush1.msra.mxu0 0.0
    %188 = vmatprep.subr.mxu0 0.0
    %189 = vmatpush1.msra.mxu0 0.0
    %190 = vmatprep.subr.mxu0 0.0
    %191 = vmatpush1.msra.mxu0 0.0
    %192 = vmatprep.subr.mxu0 0.0
    %193 = vmatpush1.msra.mxu0 0.0
    %194 = vmatprep.mubr.f32.mxu0 0.0
    %195 = vmatmul.mubr.f32.gmra.mrb[0].mxu0 %v128
    %v196 = vpop.f32.mrb[0].mxu0
    %v197 = vadd.f32 %v125, %v196
    %v198 = vpop.f32.mrb[0].mxu0
    %199 = vdwg.mxu0
    %vm200 = vcmask 64512
    %201 = vst.msk [vmem:[#allocation4] sm:$0xff] %vm200, %v197
    // Predicated region
    $region26: #{tpu_custom_call.1} parent=1 // pred_check
      _
    $region27: #{tpu_custom_call.1} parent=1 // pred_check_branch
      %203 = sbr.rel (0) target = $region29
    $region28: #{tpu_custom_call.1} parent=1 // pred_region
      %s205 = ssub.s32 128, 128
      %206 = vsyncadd [#allocation3], %s205
      %s208 = sshll.u32 [#allocation2], 4
      %s209 = int_to_ptr.vmem [resolvable:$true] %s208
      %211 = dma.vmem_to_hbm [thread:$0]  %s209, 128, %s6, [#allocation3]
    $region29: #{tpu_custom_call.1} parent=1 // pred_fallthru
      _
    // Predicated region
    $region30: #{tpu_custom_call.1} parent=1 // pred_check
      _
    $region31: #{tpu_custom_call.1} parent=1 // pred_check_branch
      %213 = sbr.rel (0) target = $region33
    $region32: #{tpu_custom_call.1} parent=1 // pred_region
      %s215 = ssub.s32 128, 128
      %216 = vsyncadd [#allocation5], %s215
      %s218 = sshll.u32 [#allocation4], 4
      %s219 = int_to_ptr.vmem [resolvable:$true] %s218
      %221 = dma.vmem_to_hbm [thread:$0]  %s219, 128, %s7, [#allocation5]
    $region33: #{tpu_custom_call.1} parent=1 // pred_fallthru
      _
    // Predicated region
    $region34: #{tpu_custom_call.1} parent=1 // pred_check
      _
    $region35: #{tpu_custom_call.1} parent=1 // pred_check_branch
      %223 = sbr.rel (0) target = $region37
    $region36: #{tpu_custom_call.1} parent=1 // pred_region
      %224 = dma.done [#allocation3], 128
    $region37: #{tpu_custom_call.1} parent=1 // pred_fallthru
      _
    // Predicated region
    $region38: #{tpu_custom_call.1} parent=1 // pred_check
      _
    $region39: #{tpu_custom_call.1} parent=1 // pred_check_branch
      %226 = sbr.rel (0) target = $region41
    $region40: #{tpu_custom_call.1} parent=1 // pred_region
      %227 = dma.done [#allocation5], 128
    $region41: #{tpu_custom_call.1} parent=1 // pred_fallthru
      _
    %228 = vsyncpa [#allocation3], 1
    %229 = vsyncpa [#allocation5], 1

</llo_original>
